<compile_context>
chip_gen: v7x
topology: tpu7x:2x2x1
jax: 0.10.0
libtpu: 0.0.40
codegen_flags: <defaults>
</compile_context>

<pallas_src>
import functools

import jax
import jax.numpy as jnp
import numpy as np
from jax import lax
from jax.experimental import pallas as pl
from jax.experimental.pallas import tpu as pltpu

_KH = 2
_KW = 2
_STRIDE = 2


def _conv2x2_relu_kernel(x_ref, wall_ref, brow_ref, o_ref, a_scr, *, batch, cin, oh):
    """Whole-batch Conv2d(k=2, s=2) + bias + ReLU in one fused MXU matmul.

    x_ref:    (B*Cin*OH, KH*W)     row (b*Cin + c)*OH + oh, col kh*W + w  (free reshape of NCHW)
    wall_ref: (Cin*KH*W, Cout*OW)  conv weights with the kw (column) selection folded in
    brow_ref: (1, Cout*OW)         bias replicated along ow
    o_ref:    (B*OH, Cout*OW)      output slab, row b*OH + oh, col n*OW + ow
    a_scr:    (B*OH, Cin*KH*W)     VMEM scratch holding the assembled patch matrix A
    """
    khw = x_ref.shape[1]  # KH * W

    # Assemble A[(b,oh), (c,kh,w)] = x[b, c, 2*oh + kh, w] with static slice copies:
    # source row-block (b, c) of x_ref lands at rows b*OH.., lanes c*KH*W.. of the scratch.
    for c in range(cin):
        for b in range(batch):
            a_scr[b * oh:(b + 1) * oh, c * khw:(c + 1) * khw] = (
                x_ref[(b * cin + c) * oh:(b * cin + c + 1) * oh, :])

    # One fused MXU matmul: (B*OH, Cin*KH*W) @ (Cin*KH*W, Cout*OW), f32 accumulation.
    acc = jnp.dot(a_scr[...], wall_ref[...], preferred_element_type=jnp.float32)

    # Single slab epilogue: broadcast bias row + one ReLU over the whole result.
    o_ref[...] = jnp.maximum(acc + brow_ref[...], 0.0)


def _fold_conv_weight(weight, width):
    """Fold the stride-2 column (kw) selection into the conv weight (flat 2-D slab).

    Returns Wall of shape (Cin*KH*W, Cout*OW) with
        Wall[(c*KH + kh)*W + w, n*OW + ow] = weight[n, c, kh, w - 2*ow]  if (w - 2*ow) in {0, 1}
                                             0                           otherwise
    so that  out[(b,oh), (n,ow)] = A[(b,oh), :] @ Wall[:, (n,ow)]  reproduces the conv.
    """
    cout, cin, kh, kw = weight.shape
    ow = width // _STRIDE
    w_ids = jnp.arange(width)
    # sel[k, w, o] = 1.0 iff w == 2*o + k
    sel = (w_ids[None, :, None]
           == _STRIDE * jnp.arange(ow)[None, None, :] + jnp.arange(kw)[:, None, None])
    sel = sel.astype(weight.dtype)                               # (KW, W, OW)
    wall = jnp.einsum("nckq,qwo->ckwno", weight, sel)            # (Cin, KH, W, Cout, OW)
    return wall.reshape(cin * kh * width, cout * ow)


@jax.jit
def net_no_pooling_forward(x, weight, bias):
    """Conv2d(Cin -> Cout, kernel_size=2, stride=2) + ReLU.  x: (B, Cin, H, W) NCHW."""
    b, cin, h, w = x.shape
    cout = weight.shape[0]
    assert weight.shape == (cout, cin, _KH, _KW)
    assert h % 2 == 0 and w % 2 == 0, "H and W must be even (stride-2, no padding)"
    oh, ow = h // 2, w // 2

    # Free, contiguous reshape (no HBM transpose / im2col): row (b*Cin + c)*OH + oh, col kh*W + w.
    x2 = x.astype(jnp.float32).reshape(b * cin * oh, _KH * w)
    wall = _fold_conv_weight(weight.astype(jnp.float32), w)     # parameter-sized, tiny
    brow = jnp.repeat(bias.astype(jnp.float32), ow)[None, :]    # (1, Cout*OW)

    kernel = functools.partial(_conv2x2_relu_kernel, batch=b, cin=cin, oh=oh)
    out2d = pl.pallas_call(
        kernel,
        out_shape=jax.ShapeDtypeStruct((b * oh, cout * ow), jnp.float32),
        grid=(1,),   # single step: whole problem is one VMEM-resident block
        in_specs=[
            pl.BlockSpec((b * cin * oh, _KH * w), lambda i: (0, 0)),
            pl.BlockSpec((cin * _KH * w, cout * ow), lambda i: (0, 0)),
            pl.BlockSpec((1, cout * ow), lambda i: (0, 0)),
        ],
        out_specs=pl.BlockSpec((b * oh, cout * ow), lambda i: (0, 0)),
        scratch_shapes=[pltpu.VMEM((b * oh, cin * _KH * w), jnp.float32)],
    )(x2, wall, brow)

    # Layout plumbing only (~2 KB): (B*OH, Cout*OW) -> (B, Cout, OH, OW).
    return out2d.reshape(b, oh, cout, ow).transpose(0, 2, 1, 3)


def _reference_forward(x, weight, bias):
    # Pure-JAX reference (XLA conv) for validation.
    out = lax.conv_general_dilated(
        x, weight, window_strides=(2, 2), padding="VALID",
        dimension_numbers=("NCHW", "OIHW", "NCHW"))
    out = out + bias.reshape(1, -1, 1, 1)
    return jnp.maximum(out, 0.0)


if __name__ == "__main__":
    key = jax.random.PRNGKey(0)
    kx, kwt, kbs = jax.random.split(key, 3)

    # Input: batch=2, channels=2 (DVS polarity channels), spatial=16x16.
    B, Cin, H, W = 2, 2, 16, 16
    Cout = 4
    x = jax.random.normal(kx, (B, Cin, H, W), dtype=jnp.float32)

    # Deterministic parameter init (PyTorch-style uniform bound 1/sqrt(fan_in)).
    fan_in = Cin * _KH * _KW
    bound = 1.0 / np.sqrt(fan_in)
    weight = jax.random.uniform(kwt, (Cout, Cin, _KH, _KW), jnp.float32, -bound, bound)
    bias = jax.random.uniform(kbs, (Cout,), jnp.float32, -bound, bound)

    out = jax.block_until_ready(net_no_pooling_forward(x, weight, bias))
    ref = jax.block_until_ready(_reference_forward(x, weight, bias))

    np.testing.assert_allclose(np.asarray(out), np.asarray(ref), rtol=1e-5, atol=1e-5)
    assert out.shape == (B, Cout, H // 2, W // 2)
    print("KERNEL_OK")
</pallas_src>

<mosaic_0001>
module attributes {stable_mosaic.version = 11 : i64} {
  func.func @_conv2x2_relu_kernel(%arg0: i32, %arg1: memref<32x32xf32, #tpu.memory_space<vmem>>, %arg2: memref<64x32xf32, #tpu.memory_space<vmem>>, %arg3: memref<1x32xf32, #tpu.memory_space<vmem>>, %arg4: memref<16x32xf32, #tpu.memory_space<vmem>>, %arg5: memref<16x64xf32, #tpu.memory_space<vmem>>) attributes {dimension_semantics = [#tpu.dimension_semantics<arbitrary>], iteration_bounds = array<i64: 1>, scalar_prefetch = 0 : i64, scratch_operands = 1 : i64, tpu.core_type = #tpu.core_type<tc>, window_params = [{pipeline_mode = #tpu.pipeline_mode<synchronous>, transform_indices = @transform_0, window_bounds = array<i64: 32, 32>}, {pipeline_mode = #tpu.pipeline_mode<synchronous>, transform_indices = @transform_1, window_bounds = array<i64: 64, 32>}, {pipeline_mode = #tpu.pipeline_mode<synchronous>, transform_indices = @transform_2, window_bounds = array<i64: 1, 32>}, {pipeline_mode = #tpu.pipeline_mode<synchronous>, transform_indices = @transform_3, window_bounds = array<i64: 16, 32>}]} {
    %c0 = arith.constant 0 : index
    %c0_0 = arith.constant 0 : index
    %0 = vector.load %arg1[%c0, %c0_0] : memref<32x32xf32, #tpu.memory_space<vmem>>, vector<8x32xf32>
    %c0_1 = arith.constant 0 : index
    %c0_2 = arith.constant 0 : index
    %1 = vector.load %arg5[%c0_1, %c0_2] : memref<16x64xf32, #tpu.memory_space<vmem>>, vector<8x32xf32>
    tpu.vector_store %arg5[%c0_1, %c0_2], %0 {strides = array<i32>} : memref<16x64xf32, #tpu.memory_space<vmem>>, vector<8x32xf32>,
    %c16 = arith.constant 16 : index
    %c0_3 = arith.constant 0 : index
    %2 = vector.load %arg1[%c16, %c0_3] : memref<32x32xf32, #tpu.memory_space<vmem>>, vector<8x32xf32>
    %c8 = arith.constant 8 : index
    %c0_4 = arith.constant 0 : index
    %3 = vector.load %arg5[%c8, %c0_4] : memref<16x64xf32, #tpu.memory_space<vmem>>, vector<8x32xf32>
    tpu.vector_store %arg5[%c8, %c0_4], %2 {strides = array<i32>} : memref<16x64xf32, #tpu.memory_space<vmem>>, vector<8x32xf32>,
    %c8_5 = arith.constant 8 : index
    %c0_6 = arith.constant 0 : index
    %4 = vector.load %arg1[%c8_5, %c0_6] : memref<32x32xf32, #tpu.memory_space<vmem>>, vector<8x32xf32>
    %c0_7 = arith.constant 0 : index
    %c32 = arith.constant 32 : index
    %5 = vector.load %arg5[%c0_7, %c32] : memref<16x64xf32, #tpu.memory_space<vmem>>, vector<8x32xf32>
    tpu.vector_store %arg5[%c0_7, %c32], %4 {strides = array<i32>} : memref<16x64xf32, #tpu.memory_space<vmem>>, vector<8x32xf32>,
    %c24 = arith.constant 24 : index
    %c0_8 = arith.constant 0 : index
    %6 = vector.load %arg1[%c24, %c0_8] : memref<32x32xf32, #tpu.memory_space<vmem>>, vector<8x32xf32>
    %c8_9 = arith.constant 8 : index
    %c32_10 = arith.constant 32 : index
    %7 = vector.load %arg5[%c8_9, %c32_10] : memref<16x64xf32, #tpu.memory_space<vmem>>, vector<8x32xf32>
    tpu.vector_store %arg5[%c8_9, %c32_10], %6 {strides = array<i32>} : memref<16x64xf32, #tpu.memory_space<vmem>>, vector<8x32xf32>,
    %c0_11 = arith.constant 0 : index
    %c0_12 = arith.constant 0 : index
    %8 = vector.load %arg5[%c0_11, %c0_12] : memref<16x64xf32, #tpu.memory_space<vmem>>, vector<16x64xf32>
    %c0_13 = arith.constant 0 : index
    %c0_14 = arith.constant 0 : index
    %9 = vector.load %arg2[%c0_13, %c0_14] : memref<64x32xf32, #tpu.memory_space<vmem>>, vector<64x32xf32>
    %cst = arith.constant dense<0.000000e+00> : vector<16x32xf32>
    %10 = tpu.matmul %8, %9, %cst {dimension_numbers = #tpu.dot_dimension_numbers<[1], [0], [0], [1], [0, 0, 1, 1], [], []>} : vector<16x64xf32>, vector<64x32xf32>, vector<16x32xf32> -> vector<16x32xf32>
    %c0_15 = arith.constant 0 : index
    %c0_16 = arith.constant 0 : index
    %11 = vector.load %arg3[%c0_15, %c0_16] : memref<1x32xf32, #tpu.memory_space<vmem>>, vector<1x32xf32>
    %12 = vector.broadcast %11 : vector<1x32xf32> to vector<16x32xf32>
    %13 = arith.addf %10, %12 : vector<16x32xf32>
    %cst_17 = arith.constant 0.000000e+00 : f32
    %14 = vector.broadcast %cst_17 : f32 to vector<16x32xf32>
    %15 = arith.maximumf %13, %14 : vector<16x32xf32>
    %c0_18 = arith.constant 0 : index
    %c0_19 = arith.constant 0 : index
    %16 = vector.load %arg4[%c0_18, %c0_19] : memref<16x32xf32, #tpu.memory_space<vmem>>, vector<16x32xf32>
    tpu.vector_store %arg4[%c0_18, %c0_19], %15 {strides = array<i32>} : memref<16x32xf32, #tpu.memory_space<vmem>>, vector<16x32xf32>,
    return
  }
  func.func @transform_0(%arg0: i32) -> (i32, i32) {
    %c0_i32 = arith.constant 0 : i32
    %c0_i32_0 = arith.constant 0 : i32
    %c0_i32_1 = arith.constant 0 : i32
    return %c0_i32, %c0_i32_0 : i32, i32
  }
  func.func @transform_1(%arg0: i32) -> (i32, i32) {
    %c0_i32 = arith.constant 0 : i32
    %c0_i32_0 = arith.constant 0 : i32
    %c0_i32_1 = arith.constant 0 : i32
    return %c0_i32, %c0_i32_0 : i32, i32
  }
  func.func @transform_2(%arg0: i32) -> (i32, i32) {
    %c0_i32 = arith.constant 0 : i32
    %c0_i32_0 = arith.constant 0 : i32
    %c0_i32_1 = arith.constant 0 : i32
    return %c0_i32, %c0_i32_0 : i32, i32
  }
  func.func @transform_3(%arg0: i32) -> (i32, i32) {
    %c0_i32 = arith.constant 0 : i32
    %c0_i32_0 = arith.constant 0 : i32
    %c0_i32_1 = arith.constant 0 : i32
    return %c0_i32, %c0_i32_0 : i32, i32
  }
}

</mosaic_0001>

<llo_original>
// kernel: net_no_pooling_forward.1
$region0: #{net_no_pooling_forward.1}
  #allocation0 [shape = 'u32[]', space=smem, size = 0x4, offset = 0x4, fixed_abs, tag = 'smem constant byte address 0x4 - core index']
  #allocation1 [shape = 'u32[144,128]{1,0:T(1,128)}', space=vmem, size = 0x12000, scoped, tag = 'internal scratch']
  #allocation2 [shape = 'f32[16,64]{1,0:T(8,128)}', space=vmem, size = 0x2000, scoped, tag = 'scratch operand']
  %s0 = inlined_call_operand.vmem [shape: f32[32,32], index: 0, kind: input, shape index: {}]
  %s1 = inlined_call_operand.vmem [shape: f32[64,32], index: 1, kind: input, shape index: {}]
  %s2 = inlined_call_operand.vmem [shape: f32[1,32], index: 2, kind: input, shape index: {}]
  %s3 = inlined_call_operand.vmem [shape: f32[16,32], index: 3, kind: output, shape index: {}]
  %s4 = sld [smem:[#allocation0]]
  $region22: #{net_no_pooling_forward.1} parent=0
    _
  %s6 = ssub.s32 1, %s4
  %s7 = scalar_select 0, %s6, %s4
  // Predicated region
  $region2: #{net_no_pooling_forward.1} parent=0 // pred_check
    _
  $region3: #{net_no_pooling_forward.1} parent=0 // pred_check_branch
    %9 = sbr.rel (0) target = $region5
  $region4: #{net_no_pooling_forward.1} parent=0 // pred_region
    _
  $region5: #{net_no_pooling_forward.1} parent=0 // pred_fallthru
    _
  // Predicated region
  $region6: #{net_no_pooling_forward.1} parent=0 // pred_check
    _
  $region7: #{net_no_pooling_forward.1} parent=0 // pred_check_branch
    %11 = sbr.rel (0) target = $region9
  $region8: #{net_no_pooling_forward.1} parent=0 // pred_region
    _
  $region9: #{net_no_pooling_forward.1} parent=0 // pred_fallthru
    _
  // Predicated region
  $region10: #{net_no_pooling_forward.1} parent=0 // pred_check
    _
  $region11: #{net_no_pooling_forward.1} parent=0 // pred_check_branch
    %13 = sbr.rel (0) target = $region13
  $region12: #{net_no_pooling_forward.1} parent=0 // pred_region
    _
  $region13: #{net_no_pooling_forward.1} parent=0 // pred_fallthru
    _
  %v14 = vld [vmem:[%s0] sm:$0xff]
  %vm15 = vcmask 261120
  %16 = vst.msk [vmem:[#allocation2] sm:$0xff] %vm15, %v14
  %v17 = vld [vmem:[%s0 + $0x10] sm:$0xff]
  %18 = vst.msk [vmem:[#allocation2 + $0x8] sm:$0xff] %vm15, %v17
  %v19 = vld [vmem:[%s0 + $0x8] sm:$0xff]
  %21 = vrot.lane.b32.xlu0 %v19, 32
  %v22 = vpop.permute.xlu0 %21
  %vm24 = vcmask 523520
  %25 = vst.msk [vmem:[#allocation2] sm:$0xff] %vm24, %v22
  %v26 = vld [vmem:[%s0 + $0x18] sm:$0xff]
  %28 = vrot.lane.b32.xlu0 %v26, 32
  %v29 = vpop.permute.xlu0 %28
  %31 = vst.msk [vmem:[#allocation2 + $0x8] sm:$0xff] %vm24, %v29
  %v32 = vld [vmem:[#allocation2] sm:$0xff]
  %v33 = vld [vmem:[#allocation2 + $0x8] sm:$0xff]
  %v34 = vld [vmem:[%s1] sm:$0xff]
  %v35 = vld [vmem:[%s1 + $0x8] sm:$0xff]
  %v36 = vld [vmem:[%s1 + $0x10] sm:$0xff]
  %v37 = vld [vmem:[%s1 + $0x18] sm:$0xff]
  %v38 = vld [vmem:[%s1 + $0x20] sm:$0xff]
  %v39 = vld [vmem:[%s1 + $0x28] sm:$0xff]
  %v40 = vld [vmem:[%s1 + $0x30] sm:$0xff]
  %v41 = vld [vmem:[%s1 + $0x38] sm:$0xff]
  %v42 = vld [vmem:[%s2] sm:$0x1]
  %v44 = vlaneseq
  %v45 = vshrl.u32 %v44, 7
  %v46 = vsub.s32 0, %v45
  %v47 = vrot.slane %v42, %v46
  %vm49 = vcmask 523264
  %v51 = vsel %vm49, %v32, 0
  %v54 = vsel %vm49, %v33, 0
  %56 = vmatprep.subr.mxu0 0.0
  %57 = vmatpush1.msra.mxu0 %v34
  %58 = vmatprep.subr.mxu0 0.0
  %59 = vmatpush1.msra.mxu0 %v35
  %60 = vmatprep.subr.mxu0 0.0
  %61 = vmatpush1.msra.mxu0 %v36
  %62 = vmatprep.subr.mxu0 0.0
  %63 = vmatpush1.msra.mxu0 %v37
  %64 = vmatprep.subr.mxu0 0.0
  %65 = vmatpush1.msra.mxu0 %v38
  %66 = vmatprep.subr.mxu0 0.0
  %67 = vmatpush1.msra.mxu0 %v39
  %68 = vmatprep.subr.mxu0 0.0
  %69 = vmatpush1.msra.mxu0 %v40
  %70 = vmatprep.subr.mxu0 0.0
  %71 = vmatpush1.msra.mxu0 %v41
  %72 = vmatprep.subr.mxu0 0.0
  %73 = vmatpush1.msra.mxu0 0.0
  %74 = vmatprep.subr.mxu0 0.0
  %75 = vmatpush1.msra.mxu0 0.0
  %76 = vmatprep.subr.mxu0 0.0
  %77 = vmatpush1.msra.mxu0 0.0
  %78 = vmatprep.subr.mxu0 0.0
  %79 = vmatpush1.msra.mxu0 0.0
  %80 = vmatprep.subr.mxu0 0.0
  %81 = vmatpush1.msra.mxu0 0.0
  %82 = vmatprep.subr.mxu0 0.0
  %83 = vmatpush1.msra.mxu0 0.0
  %84 = vmatprep.subr.mxu0 0.0
  %85 = vmatpush1.msra.mxu0 0.0
  %86 = vmatprep.subr.mxu0 0.0
  %87 = vmatpush1.msra.mxu0 0.0
  %88 = vmatprep.subr.mxu0 0.0
  %89 = vmatpush1.msra.mxu0 0.0
  %90 = vmatprep.subr.mxu0 0.0
  %91 = vmatpush1.msra.mxu0 0.0
  %92 = vmatprep.subr.mxu0 0.0
  %93 = vmatpush1.msra.mxu0 0.0
  %94 = vmatprep.subr.mxu0 0.0
  %95 = vmatpush1.msra.mxu0 0.0
  %96 = vmatprep.subr.mxu0 0.0
  %97 = vmatpush1.msra.mxu0 0.0
  %98 = vmatprep.subr.mxu0 0.0
  %99 = vmatpush1.msra.mxu0 0.0
  %100 = vmatprep.subr.mxu0 0.0
  %101 = vmatpush1.msra.mxu0 0.0
  %102 = vmatprep.subr.mxu0 0.0
  %103 = vmatpush1.msra.mxu0 0.0
  %104 = vmatprep.subr.mxu0 0.0
  %105 = vmatpush1.msra.mxu0 0.0
  %106 = vmatprep.subr.mxu0 0.0
  %107 = vmatpush1.msra.mxu0 0.0
  %108 = vmatprep.subr.mxu0 0.0
  %109 = vmatpush1.msra.mxu0 0.0
  %110 = vmatprep.subr.mxu0 0.0
  %111 = vmatpush1.msra.mxu0 0.0
  %112 = vmatprep.subr.mxu0 0.0
  %113 = vmatpush1.msra.mxu0 0.0
  %114 = vmatprep.subr.mxu0 0.0
  %115 = vmatpush1.msra.mxu0 0.0
  %116 = vmatprep.subr.mxu0 0.0
  %117 = vmatpush1.msra.mxu0 0.0
  %118 = vmatprep.subr.mxu0 0.0
  %119 = vmatpush1.msra.mxu0 0.0
  %120 = vmatprep.mubr.f32.mxu0 0.0
  %121 = vmatmul.mubr.f32.gmra.mrb[0].mxu0 %v51
  %v122 = vpop.f32.mrb[0].mxu0
  %v123 = vadd.f32 %v47, %v122
  %v124 = vpop.f32.mrb[0].mxu0
  %125 = vmatprep.mubr.f32.mxu0 0.0
  %126 = vmatmul.mubr.f32.gmra.mrb[0].mxu0 %v54
  %v127 = vpop.f32.mrb[0].mxu0
  %v128 = vadd.f32 %v47, %v127
  %v129 = vpop.f32.mrb[0].mxu0
  %130 = vdwg.mxu0
  %v131 = vmax.f32 %v123, 0.0
  %v132 = vmax.f32 %v128, 0.0
  %133 = vst.msk [vmem:[%s3] sm:$0xff] %vm15, %v131
  %134 = vst.msk [vmem:[%s3 + $0x8] sm:$0xff] %vm15, %v132
  // Predicated region
  $region14: #{net_no_pooling_forward.1} parent=0 // pred_check
    _
  $region15: #{net_no_pooling_forward.1} parent=0 // pred_check_branch
    %136 = sbr.rel (0) target = $region17
  $region16: #{net_no_pooling_forward.1} parent=0 // pred_region
    _
  $region17: #{net_no_pooling_forward.1} parent=0 // pred_fallthru
    _
  // Predicated region
  $region18: #{net_no_pooling_forward.1} parent=0 // pred_check
    _
  $region19: #{net_no_pooling_forward.1} parent=0 // pred_check_branch
    %138 = sbr.rel (0) target = $region21
  $region20: #{net_no_pooling_forward.1} parent=0 // pred_region
    _
  $region21: #{net_no_pooling_forward.1} parent=0 // pred_fallthru
    _

</llo_original>
